<compile_context>
chip_gen: v6e
topology: v6e:2x2x1
jax: 0.10.0
libtpu: 0.0.40
codegen_flags: <defaults>
</compile_context>

<pallas_src>
import functools

import jax
import jax.numpy as jnp
from jax.experimental import pallas as pl
from jax.experimental.pallas import tpu as pltpu

HIDDEN_DIM = 128
MAX_BATCH_TILE = 512  # rows per grid step; multiple of 8 (f32 sublane packing)


def _actor_kernel(x_ref, w1_ref, b1_ref, w2_ref, b2_ref, w3_ref, b3_ref, o_ref):
    # x: [TB, obs_dim] -> h1: [TB, 128] -> h2: [TB, 128] -> probs: [TB, action_dim]
    x = x_ref[...]

    h1 = jnp.dot(x, w1_ref[...], preferred_element_type=jnp.float32) + b1_ref[...]
    h1 = jnp.maximum(h1, 0.0)  # ReLU

    h2 = jnp.dot(h1, w2_ref[...], preferred_element_type=jnp.float32) + b2_ref[...]
    h2 = jnp.maximum(h2, 0.0)  # ReLU

    logits = jnp.dot(h2, w3_ref[...], preferred_element_type=jnp.float32) + b3_ref[...]

    # Numerically-stable softmax over the action dimension (PyTorch Softmax(dim=1)).
    m = jnp.max(logits, axis=-1, keepdims=True)
    e = jnp.exp(logits - m)
    s = jnp.sum(e, axis=-1, keepdims=True)
    o_ref[...] = (e / s).astype(o_ref.dtype)


def _round_up(x, m):
    return (x + m - 1) // m * m


@functools.partial(jax.jit, static_argnames=("block_b",))
def actor_forward(state, params, *, block_b=MAX_BATCH_TILE):
    """state: [B, obs_dim] float32. Returns action probabilities: [B, action_dim] f32."""
    w1, b1, w2, b2, w3, b3 = params
    B, obs_dim = state.shape
    action_dim = w3.shape[1]
    hidden = w1.shape[1]

    # Batch tile: multiple of 8, at most block_b; pad the batch so it divides evenly.
    tb = min(block_b, _round_up(B, 8))
    b_pad = _round_up(B, tb)
    if b_pad != B:
        state = jnp.pad(state, ((0, b_pad - B), (0, 0)))
    grid = (b_pad // tb,)

    # Weights/biases: same block for every grid step -> stay resident in VMEM.
    def resident(shape):
        return pl.BlockSpec(shape, lambda i: (0, 0))

    param_bytes = sum(int(p.size) * p.dtype.itemsize for p in params)
    cost = pl.CostEstimate(
        flops=2 * b_pad * (obs_dim * hidden + hidden * hidden + hidden * action_dim),
        transcendentals=b_pad * action_dim,  # exp in the softmax
        bytes_accessed=b_pad * (obs_dim + action_dim) * 4 + param_bytes,
    )

    out = pl.pallas_call(
        _actor_kernel,
        out_shape=jax.ShapeDtypeStruct((b_pad, action_dim), jnp.float32),
        grid=grid,
        in_specs=[
            pl.BlockSpec((tb, obs_dim), lambda i: (i, 0)),  # activation tile
            resident(w1.shape),
            resident(b1.shape),
            resident(w2.shape),
            resident(b2.shape),
            resident(w3.shape),
            resident(b3.shape),
        ],
        out_specs=pl.BlockSpec((tb, action_dim), lambda i: (i, 0)),
        compiler_params=pltpu.CompilerParams(dimension_semantics=("parallel",)),
        cost_estimate=cost,
    )(state, w1, b1, w2, b2, w3, b3)

    return out[:B]


def init_actor_params(key, obs_dim, action_dim, hidden_dim=HIDDEN_DIM):
    """Deterministic init mimicking nn.Linear's U(-1/sqrt(fan_in), 1/sqrt(fan_in))."""

    def linear(key, fan_in, fan_out):
        kw, kb = jax.random.split(key)
        bound = 1.0 / jnp.sqrt(fan_in)
        # stored as [in, out] so the kernel computes x @ W + b
        w = jax.random.uniform(kw, (fan_in, fan_out), jnp.float32, -bound, bound)
        b = jax.random.uniform(kb, (1, fan_out), jnp.float32, -bound, bound)
        return w, b

    k1, k2, k3 = jax.random.split(key, 3)
    w1, b1 = linear(k1, obs_dim, hidden_dim)
    w2, b2 = linear(k2, hidden_dim, hidden_dim)
    w3, b3 = linear(k3, hidden_dim, action_dim)
    return (w1, b1, w2, b2, w3, b3)


def actor_reference(state, params):
    """Plain-JAX reference for correctness checking."""
    w1, b1, w2, b2, w3, b3 = params
    h1 = jnp.maximum(state @ w1 + b1, 0.0)
    h2 = jnp.maximum(h1 @ w2 + b2, 0.0)
    logits = h2 @ w3 + b3
    return jax.nn.softmax(logits, axis=-1)


if __name__ == "__main__":
    key = jax.random.PRNGKey(0)
    k_params, k_state = jax.random.split(key)

    batch = 8        # small batch (multiple of 8 sublanes)
    obs_dim = 16     # args.obs_shape[agent_id]
    action_dim = 5   # args.action_shape[agent_id]

    params = init_actor_params(k_params, obs_dim, action_dim)
    state = jax.random.normal(k_state, (batch, obs_dim), dtype=jnp.float32)

    probs = actor_forward(state, params)
    jax.block_until_ready(probs)

    ref = actor_reference(state, params)
    assert probs.shape == (batch, action_dim)
    assert jnp.allclose(probs, ref, atol=1e-5, rtol=1e-5)
    assert jnp.allclose(jnp.sum(probs, axis=-1), 1.0, atol=1e-5)

    print("KERNEL_OK")
</pallas_src>

<mosaic_0001>
module attributes {stable_mosaic.version = 11 : i64} {
  func.func @_actor_kernel(%arg0: i32, %arg1: memref<8x16xf32, #tpu.memory_space<vmem>>, %arg2: memref<16x128xf32, #tpu.memory_space<vmem>>, %arg3: memref<1x128xf32, #tpu.memory_space<vmem>>, %arg4: memref<128x128xf32, #tpu.memory_space<vmem>>, %arg5: memref<1x128xf32, #tpu.memory_space<vmem>>, %arg6: memref<128x5xf32, #tpu.memory_space<vmem>>, %arg7: memref<1x5xf32, #tpu.memory_space<vmem>>, %arg8: memref<8x5xf32, #tpu.memory_space<vmem>>) attributes {dimension_semantics = [#tpu.dimension_semantics<parallel>], iteration_bounds = array<i64: 1>, scalar_prefetch = 0 : i64, scratch_operands = 0 : i64, tpu.core_type = #tpu.core_type<tc>, window_params = [{transform_indices = @transform_0, window_bounds = array<i64: 8, 16>}, {pipeline_mode = #tpu.pipeline_mode<synchronous>, transform_indices = @transform_1, window_bounds = array<i64: 16, 128>}, {pipeline_mode = #tpu.pipeline_mode<synchronous>, transform_indices = @transform_2, window_bounds = array<i64: 1, 128>}, {pipeline_mode = #tpu.pipeline_mode<synchronous>, transform_indices = @transform_3, window_bounds = array<i64: 128, 128>}, {pipeline_mode = #tpu.pipeline_mode<synchronous>, transform_indices = @transform_4, window_bounds = array<i64: 1, 128>}, {pipeline_mode = #tpu.pipeline_mode<synchronous>, transform_indices = @transform_5, window_bounds = array<i64: 128, 5>}, {pipeline_mode = #tpu.pipeline_mode<synchronous>, transform_indices = @transform_6, window_bounds = array<i64: 1, 5>}, {transform_indices = @transform_7, window_bounds = array<i64: 8, 5>}]} {
    %c0 = arith.constant 0 : index
    %c0_0 = arith.constant 0 : index
    %0 = vector.load %arg1[%c0, %c0_0] : memref<8x16xf32, #tpu.memory_space<vmem>>, vector<8x16xf32>
    %c0_1 = arith.constant 0 : index
    %c0_2 = arith.constant 0 : index
    %1 = vector.load %arg2[%c0_1, %c0_2] : memref<16x128xf32, #tpu.memory_space<vmem>>, vector<16x128xf32>
    %cst = arith.constant dense<0.000000e+00> : vector<8x128xf32>
    %2 = tpu.matmul %0, %1, %cst {dimension_numbers = #tpu.dot_dimension_numbers<[1], [0], [0], [1], [0, 0, 1, 1], [], []>} : vector<8x16xf32>, vector<16x128xf32>, vector<8x128xf32> -> vector<8x128xf32>
    %c0_3 = arith.constant 0 : index
    %c0_4 = arith.constant 0 : index
    %3 = vector.load %arg3[%c0_3, %c0_4] : memref<1x128xf32, #tpu.memory_space<vmem>>, vector<1x128xf32>
    %4 = vector.broadcast %3 : vector<1x128xf32> to vector<8x128xf32>
    %5 = arith.addf %2, %4 : vector<8x128xf32>
    %cst_5 = arith.constant 0.000000e+00 : f32
    %6 = vector.broadcast %cst_5 : f32 to vector<8x128xf32>
    %7 = arith.maximumf %5, %6 : vector<8x128xf32>
    %c0_6 = arith.constant 0 : index
    %c0_7 = arith.constant 0 : index
    %8 = vector.load %arg4[%c0_6, %c0_7] : memref<128x128xf32, #tpu.memory_space<vmem>>, vector<128x128xf32>
    %cst_8 = arith.constant dense<0.000000e+00> : vector<8x128xf32>
    %9 = tpu.matmul %7, %8, %cst_8 {dimension_numbers = #tpu.dot_dimension_numbers<[1], [0], [0], [1], [0, 0, 1, 1], [], []>} : vector<8x128xf32>, vector<128x128xf32>, vector<8x128xf32> -> vector<8x128xf32>
    %c0_9 = arith.constant 0 : index
    %c0_10 = arith.constant 0 : index
    %10 = vector.load %arg5[%c0_9, %c0_10] : memref<1x128xf32, #tpu.memory_space<vmem>>, vector<1x128xf32>
    %11 = vector.broadcast %10 : vector<1x128xf32> to vector<8x128xf32>
    %12 = arith.addf %9, %11 : vector<8x128xf32>
    %cst_11 = arith.constant 0.000000e+00 : f32
    %13 = vector.broadcast %cst_11 : f32 to vector<8x128xf32>
    %14 = arith.maximumf %12, %13 : vector<8x128xf32>
    %c0_12 = arith.constant 0 : index
    %c0_13 = arith.constant 0 : index
    %15 = vector.load %arg6[%c0_12, %c0_13] : memref<128x5xf32, #tpu.memory_space<vmem>>, vector<128x5xf32>
    %cst_14 = arith.constant dense<0.000000e+00> : vector<8x5xf32>
    %16 = tpu.matmul %14, %15, %cst_14 {dimension_numbers = #tpu.dot_dimension_numbers<[1], [0], [0], [1], [0, 0, 1, 1], [], []>} : vector<8x128xf32>, vector<128x5xf32>, vector<8x5xf32> -> vector<8x5xf32>
    %c0_15 = arith.constant 0 : index
    %c0_16 = arith.constant 0 : index
    %17 = vector.load %arg7[%c0_15, %c0_16] : memref<1x5xf32, #tpu.memory_space<vmem>>, vector<1x5xf32>
    %18 = vector.broadcast %17 : vector<1x5xf32> to vector<8x5xf32>
    %19 = arith.addf %16, %18 : vector<8x5xf32>
    %cst_17 = arith.constant dense<0xFF800000> : vector<8xf32>
    %20 = vector.multi_reduction <maximumf>, %19, %cst_17 [1] : vector<8x5xf32> to vector<8xf32>
    %21 = vector.shape_cast %20 : vector<8xf32> to vector<8x1xf32>
    %22 = vector.broadcast %21 : vector<8x1xf32> to vector<8x5xf32>
    %23 = arith.subf %19, %22 : vector<8x5xf32>
    %24 = math.exp %23 : vector<8x5xf32>
    %cst_18 = arith.constant dense<0.000000e+00> : vector<8xf32>
    %25 = vector.multi_reduction <add>, %24, %cst_18 [1] : vector<8x5xf32> to vector<8xf32>
    %26 = vector.shape_cast %25 : vector<8xf32> to vector<8x1xf32>
    %27 = vector.broadcast %26 : vector<8x1xf32> to vector<8x5xf32>
    %28 = arith.divf %24, %27 : vector<8x5xf32>
    %c0_19 = arith.constant 0 : index
    %c0_20 = arith.constant 0 : index
    %29 = vector.load %arg8[%c0_19, %c0_20] : memref<8x5xf32, #tpu.memory_space<vmem>>, vector<8x5xf32>
    tpu.vector_store %arg8[%c0_19, %c0_20], %28 {strides = array<i32>} : memref<8x5xf32, #tpu.memory_space<vmem>>, vector<8x5xf32>,
    return
  }
  func.func @transform_0(%arg0: i32) -> (i32, i32) {
    %c0_i32 = arith.constant 0 : i32
    %c0_i32_0 = arith.constant 0 : i32
    return %arg0, %c0_i32 : i32, i32
  }
  func.func @transform_1(%arg0: i32) -> (i32, i32) {
    %c0_i32 = arith.constant 0 : i32
    %c0_i32_0 = arith.constant 0 : i32
    %c0_i32_1 = arith.constant 0 : i32
    return %c0_i32, %c0_i32_0 : i32, i32
  }
  func.func @transform_2(%arg0: i32) -> (i32, i32) {
    %c0_i32 = arith.constant 0 : i32
    %c0_i32_0 = arith.constant 0 : i32
    %c0_i32_1 = arith.constant 0 : i32
    return %c0_i32, %c0_i32_0 : i32, i32
  }
  func.func @transform_3(%arg0: i32) -> (i32, i32) {
    %c0_i32 = arith.constant 0 : i32
    %c0_i32_0 = arith.constant 0 : i32
    %c0_i32_1 = arith.constant 0 : i32
    return %c0_i32, %c0_i32_0 : i32, i32
  }
  func.func @transform_4(%arg0: i32) -> (i32, i32) {
    %c0_i32 = arith.constant 0 : i32
    %c0_i32_0 = arith.constant 0 : i32
    %c0_i32_1 = arith.constant 0 : i32
    return %c0_i32, %c0_i32_0 : i32, i32
  }
  func.func @transform_5(%arg0: i32) -> (i32, i32) {
    %c0_i32 = arith.constant 0 : i32
    %c0_i32_0 = arith.constant 0 : i32
    %c0_i32_1 = arith.constant 0 : i32
    return %c0_i32, %c0_i32_0 : i32, i32
  }
  func.func @transform_6(%arg0: i32) -> (i32, i32) {
    %c0_i32 = arith.constant 0 : i32
    %c0_i32_0 = arith.constant 0 : i32
    %c0_i32_1 = arith.constant 0 : i32
    return %c0_i32, %c0_i32_0 : i32, i32
  }
  func.func @transform_7(%arg0: i32) -> (i32, i32) {
    %c0_i32 = arith.constant 0 : i32
    %c0_i32_0 = arith.constant 0 : i32
    return %arg0, %c0_i32 : i32, i32
  }
}

</mosaic_0001>

<llo_original>
// kernel: actor_forward.1
$region0: #{actor_forward.1}
  #allocation0 [shape = 'u32[]', space=smem, size = 0x4, offset = 0x4, fixed_abs, tag = 'smem constant byte address 0x4 - core index']
  #allocation1 [shape = 'u32[144,128]{1,0:T(1,128)}', space=vmem, size = 0x12000, scoped, tag = 'internal scratch']
  %s0 = inlined_call_operand.vmem [shape: f32[8,16], index: 0, kind: input, shape index: {}]
  %s1 = inlined_call_operand.hbm [shape: f32[16,128], index: 1, kind: input, shape index: {}]
  %s2 = inlined_call_operand.vmem [shape: f32[1,128], index: 2, kind: input, shape index: {}]
  %s3 = inlined_call_operand.vmem [shape: f32[128,128], index: 3, kind: input, shape index: {}]
  %s4 = inlined_call_operand.hbm [shape: f32[1,128], index: 4, kind: input, shape index: {}]
  %s5 = inlined_call_operand.vmem [shape: f32[128,5], index: 5, kind: input, shape index: {}]
  %s6 = inlined_call_operand.vmem [shape: f32[1,5], index: 6, kind: input, shape index: {}]
  %s7 = inlined_call_operand.hbm [shape: f32[8,5], index: 7, kind: output, shape index: {}]
  %s8 = sld [smem:[#allocation0]]
  $region46: #{actor_forward.1} parent=0
    _
  %s10 = ssub.s32 1, %s8
  %s11 = scalar_select 0, %s10, %s8
  $region1: #{actor_forward.1} parent=0
    #allocation2 [shape = 'u8[8192]{0}', space=vmem, size = 0x2000, scoped, tag = 'input window, operand 1, single buffered']
    #allocation3 [shape = 's32[1]{0}', space=sflag, size = 0x4, scoped, tag = 'scoped memory for actor_forward.1']
    #allocation4 [shape = 's32[1]{0}', space=sflag, size = 0x4, scoped, tag = 'scoped memory for actor_forward.1']
    #allocation5 [shape = 'u8[512]{0}', space=vmem, size = 0x400, scoped, tag = 'input window, operand 4, single buffered']
    #allocation6 [shape = 's32[1]{0}', space=sflag, size = 0x4, scoped, tag = 'scoped memory for actor_forward.1']
    #allocation7 [shape = 'u8[4096]{0}', space=vmem, size = 0x1000, scoped, tag = 'output window, operand 0, single buffered']
    %12 = vsyncpa [#allocation3], 0
    %13 = vsyncpa [#allocation6], 0
    %14 = vsyncpa [#allocation4], 0
    // Predicated region
    $region2: #{actor_forward.1} parent=1 // pred_check
      _
    $region3: #{actor_forward.1} parent=1 // pred_check_branch
      %16 = sbr.rel (0) target = $region5
    $region4: #{actor_forward.1} parent=1 // pred_region
      _
    $region5: #{actor_forward.1} parent=1 // pred_fallthru
      _
    // Predicated region
    $region6: #{actor_forward.1} parent=1 // pred_check
      _
    $region7: #{actor_forward.1} parent=1 // pred_check_branch
      %18 = sbr.rel (0) target = $region9
    $region8: #{actor_forward.1} parent=1 // pred_region
      %s20 = ssub.s32 256, 256
      %21 = vsyncadd [#allocation3], %s20
      %s22 = sshll.u32 [#allocation2], 4
      %s23 = int_to_ptr.vmem [resolvable:$true] %s22
      %28 = dma.hbm_to_vmem [thread:$0]  %s1, 256, %s23, [#allocation3], 128, 128, 8
    $region9: #{actor_forward.1} parent=1 // pred_fallthru
      _
    // Predicated region
    $region10: #{actor_forward.1} parent=1 // pred_check
      _
    $region11: #{actor_forward.1} parent=1 // pred_check_branch
      %30 = sbr.rel (0) target = $region13
    $region12: #{actor_forward.1} parent=1 // pred_region
      _
    $region13: #{actor_forward.1} parent=1 // pred_fallthru
      _
    // Predicated region
    $region14: #{actor_forward.1} parent=1 // pred_check
      _
    $region15: #{actor_forward.1} parent=1 // pred_check_branch
      %32 = sbr.rel (0) target = $region17
    $region16: #{actor_forward.1} parent=1 // pred_region
      _
    $region17: #{actor_forward.1} parent=1 // pred_fallthru
      _
    // Predicated region
    $region18: #{actor_forward.1} parent=1 // pred_check
      _
    $region19: #{actor_forward.1} parent=1 // pred_check_branch
      %34 = sbr.rel (0) target = $region21
    $region20: #{actor_forward.1} parent=1 // pred_region
      %s36 = ssub.s32 16, 16
      %37 = vsyncadd [#allocation6], %s36
      %s39 = sshll.u32 [#allocation5], 4
      %s40 = int_to_ptr.vmem [resolvable:$true] %s39
      %42 = dma.hbm_to_vmem [thread:$0]  %s4, 16, %s40, [#allocation6]
    $region21: #{actor_forward.1} parent=1 // pred_fallthru
      _
    // Predicated region
    $region22: #{actor_forward.1} parent=1 // pred_check
      _
    $region23: #{actor_forward.1} parent=1 // pred_check_branch
      %44 = sbr.rel (0) target = $region25
    $region24: #{actor_forward.1} parent=1 // pred_region
      _
    $region25: #{actor_forward.1} parent=1 // pred_fallthru
      _
    // Predicated region
    $region26: #{actor_forward.1} parent=1 // pred_check
      _
    $region27: #{actor_forward.1} parent=1 // pred_check_branch
      %46 = sbr.rel (0) target = $region29
    $region28: #{actor_forward.1} parent=1 // pred_region
      _
    $region29: #{actor_forward.1} parent=1 // pred_fallthru
      _
    // Predicated region
    $region30: #{actor_forward.1} parent=1 // pred_check
      _
    $region31: #{actor_forward.1} parent=1 // pred_check_branch
      %48 = sbr.rel (0) target = $region33
    $region32: #{actor_forward.1} parent=1 // pred_region
      %49 = dma.done [#allocation3], 256
    $region33: #{actor_forward.1} parent=1 // pred_fallthru
      _
    // Predicated region
    $region34: #{actor_forward.1} parent=1 // pred_check
      _
    $region35: #{actor_forward.1} parent=1 // pred_check_branch
      %51 = sbr.rel (0) target = $region37
    $region36: #{actor_forward.1} parent=1 // pred_region
      %52 = dma.done [#allocation6], 16
    $region37: #{actor_forward.1} parent=1 // pred_fallthru
      _
    %v53 = vld [vmem:[%s0] sm:$0xff]
    %v54 = vld [vmem:[#allocation2] sm:$0xff]
    %v55 = vld [vmem:[#allocation2 + $0x8] sm:$0xff]
    %v56 = vld [vmem:[%s2] sm:$0x1]
    %v58 = vlaneseq
    %v59 = vshrl.u32 %v58, 7
    %v60 = vsub.s32 0, %v59
    %v61 = vrot.slane %v56, %v60
    %vm63 = vcmask 130048
    %v65 = vsel %vm63, %v53, 0
    %67 = vmatprep.subr.mxu0 0.0
    %68 = vmatpush1.msra.mxu0 0.0
    %69 = vmatprep.subr.mxu0 0.0
    %70 = vmatpush1.msra.mxu0 0.0
    %71 = vmatprep.subr.mxu0 0.0
    %72 = vmatpush1.msra.mxu0 0.0
    %73 = vmatprep.subr.mxu0 0.0
    %74 = vmatpush1.msra.mxu0 0.0
    %75 = vmatprep.subr.mxu0 0.0
    %76 = vmatpush1.msra.mxu0 0.0
    %77 = vmatprep.subr.mxu0 0.0
    %78 = vmatpush1.msra.mxu0 0.0
    %79 = vmatprep.subr.mxu0 0.0
    %80 = vmatpush1.msra.mxu0 0.0
    %81 = vmatprep.subr.mxu0 0.0
    %82 = vmatpush1.msra.mxu0 0.0
    %83 = vmatprep.subr.mxu0 0.0
    %84 = vmatpush1.msra.mxu0 0.0
    %85 = vmatprep.subr.mxu0 0.0
    %86 = vmatpush1.msra.mxu0 0.0
    %87 = vmatprep.subr.mxu0 0.0
    %88 = vmatpush1.msra.mxu0 0.0
    %89 = vmatprep.subr.mxu0 0.0
    %90 = vmatpush1.msra.mxu0 0.0
    %91 = vmatprep.subr.mxu0 0.0
    %92 = vmatpush1.msra.mxu0 0.0
    %93 = vmatprep.subr.mxu0 0.0
    %94 = vmatpush1.msra.mxu0 0.0
    %95 = vmatprep.subr.mxu0 0.0
    %96 = vmatpush1.msra.mxu0 %v55
    %97 = vmatprep.subr.mxu0 0.0
    %98 = vmatpush1.msra.mxu0 %v54
    %99 = vmatprep.subr.mxu0 0.0
    %100 = vmatpush2.msra.mxu0 0.0
    %101 = vmatprep.subr.mxu0 0.0
    %102 = vmatpush2.msra.mxu0 0.0
    %103 = vmatprep.subr.mxu0 0.0
    %104 = vmatpush2.msra.mxu0 0.0
    %105 = vmatprep.subr.mxu0 0.0
    %106 = vmatpush2.msra.mxu0 0.0
    %107 = vmatprep.subr.mxu0 0.0
    %108 = vmatpush2.msra.mxu0 0.0
    %109 = vmatprep.subr.mxu0 0.0
    %110 = vmatpush2.msra.mxu0 0.0
    %111 = vmatprep.subr.mxu0 0.0
    %112 = vmatpush2.msra.mxu0 0.0
    %113 = vmatprep.subr.mxu0 0.0
    %114 = vmatpush2.msra.mxu0 0.0
    %115 = vmatprep.subr.mxu0 0.0
    %116 = vmatpush2.msra.mxu0 0.0
    %117 = vmatprep.subr.mxu0 0.0
    %118 = vmatpush2.msra.mxu0 0.0
    %119 = vmatprep.subr.mxu0 0.0
    %120 = vmatpush2.msra.mxu0 0.0
    %121 = vmatprep.subr.mxu0 0.0
    %122 = vmatpush2.msra.mxu0 0.0
    %123 = vmatprep.subr.mxu0 0.0
    %124 = vmatpush2.msra.mxu0 0.0
    %125 = vmatprep.subr.mxu0 0.0
    %126 = vmatpush2.msra.mxu0 0.0
    %127 = vmatprep.subr.mxu0 0.0
    %128 = vmatpush2.msra.mxu0 0.0
    %129 = vmatprep.subr.mxu0 0.0
    %130 = vmatpush2.msra.mxu0 0.0
    %131 = vmatprep.mubr.f32.mxu0 0.0
    %132 = vmatmul.mubr.f32.gmra.mxu0 %v65
    %v133 = vpop.f32.mrf.mxu0
    %v134 = vadd.f32 %v61, %v133
    %v135 = vpop.f32.mrf.mxu0
    %136 = vdwg.mxu0
    %v137 = vmax.f32 %v134, 0.0
    %v138 = vld [vmem:[%s3] sm:$0xff]
    %v139 = vld [vmem:[%s3 + $0x8] sm:$0xff]
    %v140 = vld [vmem:[%s3 + $0x10] sm:$0xff]
    %v141 = vld [vmem:[%s3 + $0x18] sm:$0xff]
    %v142 = vld [vmem:[%s3 + $0x20] sm:$0xff]
    %v143 = vld [vmem:[%s3 + $0x28] sm:$0xff]
    %v144 = vld [vmem:[%s3 + $0x30] sm:$0xff]
    %v145 = vld [vmem:[%s3 + $0x38] sm:$0xff]
    %v146 = vld [vmem:[%s3 + $0x40] sm:$0xff]
    %v147 = vld [vmem:[%s3 + $0x48] sm:$0xff]
    %v148 = vld [vmem:[%s3 + $0x50] sm:$0xff]
    %v149 = vld [vmem:[%s3 + $0x58] sm:$0xff]
    %v150 = vld [vmem:[%s3 + $0x60] sm:$0xff]
    %v151 = vld [vmem:[%s3 + $0x68] sm:$0xff]
    %v152 = vld [vmem:[%s3 + $0x70] sm:$0xff]
    %v153 = vld [vmem:[%s3 + $0x78] sm:$0xff]
    %v154 = vld [vmem:[#allocation5] sm:$0x1]
    %v156 = vlaneseq
    %v157 = vshrl.u32 %v156, 7
    %v158 = vsub.s32 0, %v157
    %v159 = vrot.slane %v154, %v158
    %161 = vmatprep.subr.mxu0 0.0
    %162 = vmatpush1.msra.mxu0 %v153
    %163 = vmatprep.subr.mxu0 0.0
    %164 = vmatpush1.msra.mxu0 %v152
    %165 = vmatprep.subr.mxu0 0.0
    %166 = vmatpush1.msra.mxu0 %v151
    %167 = vmatprep.subr.mxu0 0.0
    %168 = vmatpush1.msra.mxu0 %v150
    %169 = vmatprep.subr.mxu0 0.0
    %170 = vmatpush1.msra.mxu0 %v149
    %171 = vmatprep.subr.mxu0 0.0
    %172 = vmatpush1.msra.mxu0 %v148
    %173 = vmatprep.subr.mxu0 0.0
    %174 = vmatpush1.msra.mxu0 %v147
    %175 = vmatprep.subr.mxu0 0.0
    %176 = vmatpush1.msra.mxu0 %v146
    %177 = vmatprep.subr.mxu0 0.0
    %178 = vmatpush1.msra.mxu0 %v145
    %179 = vmatprep.subr.mxu0 0.0
    %180 = vmatpush1.msra.mxu0 %v144
    %181 = vmatprep.subr.mxu0 0.0
    %182 = vmatpush1.msra.mxu0 %v143
    %183 = vmatprep.subr.mxu0 0.0
    %184 = vmatpush1.msra.mxu0 %v142
    %185 = vmatprep.subr.mxu0 0.0
    %186 = vmatpush1.msra.mxu0 %v141
    %187 = vmatprep.subr.mxu0 0.0
    %188 = vmatpush1.msra.mxu0 %v140
    %189 = vmatprep.subr.mxu0 0.0
    %190 = vmatpush1.msra.mxu0 %v139
    %191 = vmatprep.subr.mxu0 0.0
    %192 = vmatpush1.msra.mxu0 %v138
    %193 = vmatprep.subr.mxu0 0.0
    %194 = vmatpush2.msra.mxu0 0.0
    %195 = vmatprep.subr.mxu0 0.0
    %196 = vmatpush2.msra.mxu0 0.0
    %197 = vmatprep.subr.mxu0 0.0
    %198 = vmatpush2.msra.mxu0 0.0
    %199 = vmatprep.subr.mxu0 0.0
    %200 = vmatpush2.msra.mxu0 0.0
    %201 = vmatprep.subr.mxu0 0.0
    %202 = vmatpush2.msra.mxu0 0.0
    %203 = vmatprep.subr.mxu0 0.0
    %204 = vmatpush2.msra.mxu0 0.0
    %205 = vmatprep.subr.mxu0 0.0
    %206 = vmatpush2.msra.mxu0 0.0
    %207 = vmatprep.subr.mxu0 0.0
    %208 = vmatpush2.msra.mxu0 0.0
    %209 = vmatprep.subr.mxu0 0.0
    %210 = vmatpush2.msra.mxu0 0.0
    %211 = vmatprep.subr.mxu0 0.0
    %212 = vmatpush2.msra.mxu0 0.0
    %213 = vmatprep.subr.mxu0 0.0
    %214 = vmatpush2.msra.mxu0 0.0
    %215 = vmatprep.subr.mxu0 0.0
    %216 = vmatpush2.msra.mxu0 0.0
    %217 = vmatprep.subr.mxu0 0.0
    %218 = vmatpush2.msra.mxu0 0.0
    %219 = vmatprep.subr.mxu0 0.0
    %220 = vmatpush2.msra.mxu0 0.0
    %221 = vmatprep.subr.mxu0 0.0
    %222 = vmatpush2.msra.mxu0 0.0
    %223 = vmatprep.subr.mxu0 0.0
    %224 = vmatpush2.msra.mxu0 0.0
    %225 = vmatprep.mubr.f32.mxu0 0.0
    %226 = vmatmul.mubr.f32.gmra.mxu0 %v137
    %v227 = vpop.f32.mrf.mxu0
    %v228 = vadd.f32 %v159, %v227
    %v229 = vpop.f32.mrf.mxu0
    %230 = vdwg.mxu0
    %v231 = vmax.f32 %v228, 0.0
    %v232 = vld [vmem:[%s5] sm:$0xff]
    %v233 = vld [vmem:[%s5 + $0x8] sm:$0xff]
    %v234 = vld [vmem:[%s5 + $0x10] sm:$0xff]
    %v235 = vld [vmem:[%s5 + $0x18] sm:$0xff]
    %v236 = vld [vmem:[%s5 + $0x20] sm:$0xff]
    %v237 = vld [vmem:[%s5 + $0x28] sm:$0xff]
    %v238 = vld [vmem:[%s5 + $0x30] sm:$0xff]
    %v239 = vld [vmem:[%s5 + $0x38] sm:$0xff]
    %v240 = vld [vmem:[%s5 + $0x40] sm:$0xff]
    %v241 = vld [vmem:[%s5 + $0x48] sm:$0xff]
    %v242 = vld [vmem:[%s5 + $0x50] sm:$0xff]
    %v243 = vld [vmem:[%s5 + $0x58] sm:$0xff]
    %v244 = vld [vmem:[%s5 + $0x60] sm:$0xff]
    %v245 = vld [vmem:[%s5 + $0x68] sm:$0xff]
    %v246 = vld [vmem:[%s5 + $0x70] sm:$0xff]
    %v247 = vld [vmem:[%s5 + $0x78] sm:$0xff]
    %v248 = vld [vmem:[%s6] sm:$0x1]
    %v250 = vlaneseq
    %v251 = vshrl.u32 %v250, 7
    %v252 = vsub.s32 0, %v251
    %v253 = vrot.slane %v248, %v252
    %255 = vmatprep.subr.mxu0 0.0
    %256 = vmatpush1.msra.mxu0 %v247
    %257 = vmatprep.subr.mxu0 0.0
    %258 = vmatpush1.msra.mxu0 %v246
    %259 = vmatprep.subr.mxu0 0.0
    %260 = vmatpush1.msra.mxu0 %v245
    %261 = vmatprep.subr.mxu0 0.0
    %262 = vmatpush1.msra.mxu0 %v244
    %263 = vmatprep.subr.mxu0 0.0
    %264 = vmatpush1.msra.mxu0 %v243
    %265 = vmatprep.subr.mxu0 0.0
    %266 = vmatpush1.msra.mxu0 %v242
    %267 = vmatprep.subr.mxu0 0.0
    %268 = vmatpush1.msra.mxu0 %v241
    %269 = vmatprep.subr.mxu0 0.0
    %270 = vmatpush1.msra.mxu0 %v240
    %271 = vmatprep.subr.mxu0 0.0
    %272 = vmatpush1.msra.mxu0 %v239
    %273 = vmatprep.subr.mxu0 0.0
    %274 = vmatpush1.msra.mxu0 %v238
    %275 = vmatprep.subr.mxu0 0.0
    %276 = vmatpush1.msra.mxu0 %v237
    %277 = vmatprep.subr.mxu0 0.0
    %278 = vmatpush1.msra.mxu0 %v236
    %279 = vmatprep.subr.mxu0 0.0
    %280 = vmatpush1.msra.mxu0 %v235
    %281 = vmatprep.subr.mxu0 0.0
    %282 = vmatpush1.msra.mxu0 %v234
    %283 = vmatprep.subr.mxu0 0.0
    %284 = vmatpush1.msra.mxu0 %v233
    %285 = vmatprep.subr.mxu0 0.0
    %286 = vmatpush1.msra.mxu0 %v232
    %287 = vmatprep.subr.mxu0 0.0
    %288 = vmatpush2.msra.mxu0 0.0
    %289 = vmatprep.subr.mxu0 0.0
    %290 = vmatpush2.msra.mxu0 0.0
    %291 = vmatprep.subr.mxu0 0.0
    %292 = vmatpush2.msra.mxu0 0.0
    %293 = vmatprep.subr.mxu0 0.0
    %294 = vmatpush2.msra.mxu0 0.0
    %295 = vmatprep.subr.mxu0 0.0
    %296 = vmatpush2.msra.mxu0 0.0
    %297 = vmatprep.subr.mxu0 0.0
    %298 = vmatpush2.msra.mxu0 0.0
    %299 = vmatprep.subr.mxu0 0.0
    %300 = vmatpush2.msra.mxu0 0.0
    %301 = vmatprep.subr.mxu0 0.0
    %302 = vmatpush2.msra.mxu0 0.0
    %303 = vmatprep.subr.mxu0 0.0
    %304 = vmatpush2.msra.mxu0 0.0
    %305 = vmatprep.subr.mxu0 0.0
    %306 = vmatpush2.msra.mxu0 0.0
    %307 = vmatprep.subr.mxu0 0.0
    %308 = vmatpush2.msra.mxu0 0.0
    %309 = vmatprep.subr.mxu0 0.0
    %310 = vmatpush2.msra.mxu0 0.0
    %311 = vmatprep.subr.mxu0 0.0
    %312 = vmatpush2.msra.mxu0 0.0
    %313 = vmatprep.subr.mxu0 0.0
    %314 = vmatpush2.msra.mxu0 0.0
    %315 = vmatprep.subr.mxu0 0.0
    %316 = vmatpush2.msra.mxu0 0.0
    %317 = vmatprep.subr.mxu0 0.0
    %318 = vmatpush2.msra.mxu0 0.0
    %319 = vmatprep.mubr.f32.mxu0 0.0
    %320 = vmatmul.mubr.f32.gmra.mxu0 %v231
    %v321 = vpop.f32.mrf.mxu0
    %v322 = vadd.f32 %v253, %v321
    %v323 = vpop.f32.mrf.mxu0
    %324 = vdwg.mxu0
    %vm325 = vcmask 39936
    %v326 = vsel %vm325, %v322, -inf
    %327 = vmax.xlane.f32.xlu0 %v326
    %v328 = vpop.xlane.xlu0 %327
    %v329 = vsub.f32 %v322, %v328
    %v330 = vmul.f32 %v329, 1.442695
    %v331 = vpow.pop %v330
    %v332 = vsel %vm325, %v331, 0.0
    %333 = vadd.xlane.f32.xlu0 %v332
    %v334 = vpop.xlane.xlu0 %333
    %v335 = vrcp.pop %v334
    %v336 = vmul.f32 %v331, %v335
    %337 = vst.msk [vmem:[#allocation7] sm:$0xff] %vm325, %v336
    // Predicated region
    $region38: #{actor_forward.1} parent=1 // pred_check
      _
    $region39: #{actor_forward.1} parent=1 // pred_check_branch
      %339 = sbr.rel (0) target = $region41
    $region40: #{actor_forward.1} parent=1 // pred_region
      %s341 = ssub.s32 128, 128
      %342 = vsyncadd [#allocation4], %s341
      %s344 = sshll.u32 [#allocation7], 4
      %s345 = int_to_ptr.vmem [resolvable:$true] %s344
      %347 = dma.vmem_to_hbm [thread:$0]  %s345, 128, %s7, [#allocation4]
    $region41: #{actor_forward.1} parent=1 // pred_fallthru
      _
    // Predicated region
    $region42: #{actor_forward.1} parent=1 // pred_check
      _
    $region43: #{actor_forward.1} parent=1 // pred_check_branch
      %349 = sbr.rel (0) target = $region45
    $region44: #{actor_forward.1} parent=1 // pred_region
      %350 = dma.done [#allocation4], 128
    $region45: #{actor_forward.1} parent=1 // pred_fallthru
      _
    %351 = vsyncpa [#allocation3], 1
    %352 = vsyncpa [#allocation6], 1
    %353 = vsyncpa [#allocation4], 1

</llo_original>
